<compile_context>
chip_gen: v7x
topology: tpu7x:2x2x1
jax: 0.10.0
libtpu: 0.0.40
codegen_flags: <defaults>
</compile_context>

<pallas_src>
import functools

import jax
import jax.numpy as jnp
from jax import lax
from jax.experimental import pallas as pl
from jax.experimental.pallas import tpu as pltpu

_NEG_INF = -1e30  # large finite negative: avoids inf-inf NaN paths in softmax


def _round_up(a: int, b: int) -> int:
    return (a + b - 1) // b * b


def _flash_attention_kernel(x_q_ref, x_kv_ref, w_qkv_ref, o_ref,
                            q_scr, m_scr, l_scr, acc_scr,
                            *, seq_len, tk, d_pad, scale):
    """One (q_block, kv_block) grid step: fused projection + online-softmax attention."""
    ki = pl.program_id(1)
    nk = pl.num_programs(1)
    cdt = x_q_ref.dtype  # native MXU operand dtype (bf16 stays bf16, f32 stays f32)

    @pl.when(ki == 0)
    def _init():
        # Project queries once per resident query block; fold 1/sqrt(dim_out)
        # into q (S*d multiplies instead of S*S multiplies on the scores).
        q = jnp.dot(x_q_ref[...], w_qkv_ref[:, 0:d_pad],
                    preferred_element_type=jnp.float32)
        q_scr[...] = (q * scale).astype(q_scr.dtype)
        m_scr[...] = jnp.full_like(m_scr, _NEG_INF)
        l_scr[...] = jnp.zeros_like(l_scr)
        acc_scr[...] = jnp.zeros_like(acc_scr)

    # Fused K/V projection: a single MXU push of width 2*d_pad, then
    # 128-aligned slices of the result.
    kv = jnp.dot(x_kv_ref[...], w_qkv_ref[:, d_pad:3 * d_pad],
                 preferred_element_type=jnp.float32)
    k = kv[:, 0:d_pad].astype(cdt)
    v = kv[:, d_pad:2 * d_pad].astype(cdt)

    # scores = q @ k^T without materializing k^T: contract the last axes.
    s = lax.dot_general(q_scr[...], k, (((1,), (1,)), ((), ())),
                        preferred_element_type=jnp.float32)

    # Mask key positions that are sequence padding (seq_len is a static
    # closure; the mask constant-folds away when no padding is present).
    key_idx = ki * tk + lax.broadcasted_iota(jnp.int32, s.shape, 1)
    s = jnp.where(key_idx < seq_len, s, _NEG_INF)

    # Online softmax update.
    m_prev = m_scr[...]
    m_new = jnp.maximum(m_prev, jnp.max(s, axis=-1, keepdims=True))
    alpha = jnp.exp(m_prev - m_new)
    p = jnp.exp(s - m_new)
    l_scr[...] = alpha * l_scr[...] + jnp.sum(p, axis=-1, keepdims=True)
    acc_scr[...] = alpha * acc_scr[...] + jnp.dot(
        p.astype(cdt), v, preferred_element_type=jnp.float32)
    m_scr[...] = m_new

    @pl.when(ki == nk - 1)
    def _finalize():
        # Exact reciprocal keeps the tight f32 tolerance vs the reference;
        # approx=True is a free EUP win once compute-bound at large S.
        inv_l = pl.reciprocal(l_scr[...], approx=False)
        o_ref[...] = (acc_scr[...] * inv_l).astype(o_ref.dtype)


def self_attention_with_trainable_weights(x, w_query, w_key, w_value):
    """x: (S, dim_in); W_*: (dim_in, dim_out). Returns (S, dim_out)."""
    seq, dim_in = x.shape
    dim_out = w_query.shape[1]
    assert w_query.shape == (dim_in, dim_out)
    assert w_key.shape == (dim_in, dim_out)
    assert w_value.shape == (dim_in, dim_out)

    # Lane-dense head dim and (8,128)-legal sequence tiles.
    d_pad = _round_up(dim_out, 128)
    tile = min(_round_up(seq, 8), 256)      # 256-wide tiles feed v6e/v7x MXU; 8..256 for small S
    s_pad = _round_up(seq, tile)
    nq = s_pad // tile
    nk = s_pad // tile

    scale = 1.0 / float(dim_out) ** 0.5     # keys.shape[-1] of the ORIGINAL module

    # One-time host-side packing: pad dim_out to a lane multiple and fuse the
    # three projection weights into a single (dim_in, 3*d_pad) matrix.
    def _pad_w(w):
        return jnp.pad(w, ((0, 0), (0, d_pad - dim_out)))

    w_qkv = jnp.concatenate([_pad_w(w_query), _pad_w(w_key), _pad_w(w_value)], axis=1)
    x_p = jnp.pad(x, ((0, s_pad - seq), (0, 0)))

    kernel = functools.partial(_flash_attention_kernel,
                               seq_len=seq, tk=tile, d_pad=d_pad, scale=scale)

    out_padded = pl.pallas_call(
        kernel,
        out_shape=jax.ShapeDtypeStruct((s_pad, d_pad), x.dtype),
        grid_spec=pltpu.PrefetchScalarGridSpec(
            num_scalar_prefetch=0,
            grid=(nq, nk),
            in_specs=[
                # x rows for the resident query block.
                pl.BlockSpec((tile, dim_in), lambda qi, ki: (qi, 0)),
                # x rows for the streamed key/value block (double-buffered).
                pl.BlockSpec((tile, dim_in), lambda qi, ki: (ki, 0)),
                # Fused QKV weights: full-extent block, constant index_map -> DMA'd once.
                pl.BlockSpec((dim_in, 3 * d_pad), lambda qi, ki: (0, 0)),
            ],
            out_specs=pl.BlockSpec((tile, d_pad), lambda qi, ki: (qi, 0)),
            scratch_shapes=[
                pltpu.VMEM((tile, d_pad), x.dtype),      # scaled queries (resident)
                pltpu.VMEM((tile, 1), jnp.float32),      # running max m
                pltpu.VMEM((tile, 1), jnp.float32),      # running denom l
                pltpu.VMEM((tile, d_pad), jnp.float32),  # output accumulator
            ],
        ),
        compiler_params=pltpu.CompilerParams(
            dimension_semantics=("parallel", "arbitrary")),
    )(x_p, x_p, w_qkv)

    # Strip sequence / head-dim padding.
    return out_padded[:seq, :dim_out]


def _reference(x, w_query, w_key, w_value):
    keys = x @ w_key
    queries = x @ w_query
    values = x @ w_value
    scores = queries @ keys.T
    weights = jax.nn.softmax(scores / (keys.shape[-1] ** 0.5), axis=-1)
    return weights @ values


if __name__ == "__main__":
    key = jax.random.PRNGKey(0)
    k_x, k_q, k_k, k_v = jax.random.split(key, 4)

    # Small shapes consistent with the module: seq=8, dim_in=16, dim_out=32.
    # (At this toy size wall time is pure per-call overhead; the tiled path
    #  exists so the same kernel scales to real sequence lengths.)
    seq, dim_in, dim_out = 8, 16, 32

    # torch.rand -> uniform [0, 1); deterministic synthetic init
    x = jax.random.uniform(k_x, (seq, dim_in), dtype=jnp.float32)
    w_query = jax.random.uniform(k_q, (dim_in, dim_out), dtype=jnp.float32)
    w_key = jax.random.uniform(k_k, (dim_in, dim_out), dtype=jnp.float32)
    w_value = jax.random.uniform(k_v, (dim_in, dim_out), dtype=jnp.float32)

    out = self_attention_with_trainable_weights(x, w_query, w_key, w_value)
    out = jax.block_until_ready(out)

    ref = _reference(x, w_query, w_key, w_value)
    assert out.shape == (seq, dim_out)
    # Slightly looser than 1e-5: MXU accumulation-order differences from the
    # fused/scale-folded formulation (and bf16 inputs, if used) land ~1e-5.
    assert jnp.allclose(out, ref, atol=1e-4, rtol=1e-4), "mismatch vs reference"

    print("KERNEL_OK")
</pallas_src>

<mosaic_0001>
module attributes {stable_mosaic.version = 11 : i64} {
  func.func @_flash_attention_kernel(%arg0: i32, %arg1: i32, %arg2: memref<8x16xf32, #tpu.memory_space<vmem>>, %arg3: memref<8x16xf32, #tpu.memory_space<vmem>>, %arg4: memref<16x384xf32, #tpu.memory_space<vmem>>, %arg5: memref<8x128xf32, #tpu.memory_space<vmem>>, %arg6: memref<8x128xf32, #tpu.memory_space<vmem>>, %arg7: memref<8x1xf32, #tpu.memory_space<vmem>>, %arg8: memref<8x1xf32, #tpu.memory_space<vmem>>, %arg9: memref<8x128xf32, #tpu.memory_space<vmem>>) attributes {dimension_semantics = [#tpu.dimension_semantics<parallel>, #tpu.dimension_semantics<arbitrary>], iteration_bounds = array<i64: 1, 1>, scalar_prefetch = 0 : i64, scratch_operands = 4 : i64, tpu.core_type = #tpu.core_type<tc>, window_params = [{transform_indices = @transform_0, window_bounds = array<i64: 8, 16>}, {transform_indices = @transform_1, window_bounds = array<i64: 8, 16>}, {pipeline_mode = #tpu.pipeline_mode<synchronous>, transform_indices = @transform_2, window_bounds = array<i64: 16, 384>}, {transform_indices = @transform_3, window_bounds = array<i64: 8, 128>}]} {
    %c0_i32 = arith.constant 0 : i32
    %0 = arith.cmpi eq, %arg1, %c0_i32 : i32
    %1 = arith.extui %0 : i1 to i32
    %c0_i32_0 = arith.constant 0 : i32
    %2 = arith.cmpi ne, %1, %c0_i32_0 : i32
    scf.if %2 {
      %c0_25 = arith.constant 0 : index
      %c0_26 = arith.constant 0 : index
      %43 = vector.load %arg2[%c0_25, %c0_26] : memref<8x16xf32, #tpu.memory_space<vmem>>, vector<8x16xf32>
      %c0_27 = arith.constant 0 : index
      %c0_28 = arith.constant 0 : index
      %44 = vector.load %arg4[%c0_27, %c0_28] : memref<16x384xf32, #tpu.memory_space<vmem>>, vector<16x128xf32>
      %cst_29 = arith.constant dense<0.000000e+00> : vector<8x128xf32>
      %45 = tpu.matmul %43, %44, %cst_29 {dimension_numbers = #tpu.dot_dimension_numbers<[1], [0], [0], [1], [0, 0, 1, 1], [], []>} : vector<8x16xf32>, vector<16x128xf32>, vector<8x128xf32> -> vector<8x128xf32>
      %cst_30 = arith.constant 0.176776692 : f32
      %46 = vector.broadcast %cst_30 : f32 to vector<8x128xf32>
      %47 = arith.mulf %45, %46 : vector<8x128xf32>
      %c0_31 = arith.constant 0 : index
      %c0_32 = arith.constant 0 : index
      %48 = vector.load %arg6[%c0_31, %c0_32] : memref<8x128xf32, #tpu.memory_space<vmem>>, vector<8x128xf32>
      tpu.vector_store %arg6[%c0_31, %c0_32], %47 {strides = array<i32>} : memref<8x128xf32, #tpu.memory_space<vmem>>, vector<8x128xf32>,
      %cst_33 = arith.constant -1.000000e+30 : f32
      %49 = vector.broadcast %cst_33 : f32 to vector<8x1xf32>
      %c0_34 = arith.constant 0 : index
      %c0_35 = arith.constant 0 : index
      %50 = vector.load %arg7[%c0_34, %c0_35] : memref<8x1xf32, #tpu.memory_space<vmem>>, vector<8x1xf32>
      tpu.vector_store %arg7[%c0_34, %c0_35], %49 {strides = array<i32>} : memref<8x1xf32, #tpu.memory_space<vmem>>, vector<8x1xf32>,
      %cst_36 = arith.constant 0.000000e+00 : f32
      %51 = vector.broadcast %cst_36 : f32 to vector<8x1xf32>
      %c0_37 = arith.constant 0 : index
      %c0_38 = arith.constant 0 : index
      %52 = vector.load %arg8[%c0_37, %c0_38] : memref<8x1xf32, #tpu.memory_space<vmem>>, vector<8x1xf32>
      tpu.vector_store %arg8[%c0_37, %c0_38], %51 {strides = array<i32>} : memref<8x1xf32, #tpu.memory_space<vmem>>, vector<8x1xf32>,
      %cst_39 = arith.constant 0.000000e+00 : f32
      %53 = vector.broadcast %cst_39 : f32 to vector<8x128xf32>
      %c0_40 = arith.constant 0 : index
      %c0_41 = arith.constant 0 : index
      %54 = vector.load %arg9[%c0_40, %c0_41] : memref<8x128xf32, #tpu.memory_space<vmem>>, vector<8x128xf32>
      tpu.vector_store %arg9[%c0_40, %c0_41], %53 {strides = array<i32>} : memref<8x128xf32, #tpu.memory_space<vmem>>, vector<8x128xf32>,
    } else {
    }
    %c0 = arith.constant 0 : index
    %c0_1 = arith.constant 0 : index
    %3 = vector.load %arg3[%c0, %c0_1] : memref<8x16xf32, #tpu.memory_space<vmem>>, vector<8x16xf32>
    %c0_2 = arith.constant 0 : index
    %c128 = arith.constant 128 : index
    %4 = vector.load %arg4[%c0_2, %c128] : memref<16x384xf32, #tpu.memory_space<vmem>>, vector<16x256xf32>
    %cst = arith.constant dense<0.000000e+00> : vector<8x256xf32>
    %5 = tpu.matmul %3, %4, %cst {dimension_numbers = #tpu.dot_dimension_numbers<[1], [0], [0], [1], [0, 0, 1, 1], [], []>} : vector<8x16xf32>, vector<16x256xf32>, vector<8x256xf32> -> vector<8x256xf32>
    %6 = vector.extract_strided_slice %5 {offsets = [0, 0], sizes = [8, 128], strides = [1, 1]} : vector<8x256xf32> to vector<8x128xf32>
    %7 = vector.extract_strided_slice %5 {offsets = [0, 128], sizes = [8, 128], strides = [1, 1]} : vector<8x256xf32> to vector<8x128xf32>
    %c0_3 = arith.constant 0 : index
    %c0_4 = arith.constant 0 : index
    %8 = vector.load %arg6[%c0_3, %c0_4] : memref<8x128xf32, #tpu.memory_space<vmem>>, vector<8x128xf32>
    %cst_5 = arith.constant dense<0.000000e+00> : vector<8x8xf32>
    %9 = tpu.matmul %8, %6, %cst_5 {dimension_numbers = #tpu.dot_dimension_numbers<[1], [1], [0], [0], [0, 0, 1, 0], [], []>} : vector<8x128xf32>, vector<8x128xf32>, vector<8x8xf32> -> vector<8x8xf32>
    %c8_i32 = arith.constant 8 : i32
    %10 = arith.muli %arg1, %c8_i32 : i32
    %11 = tpu.iota {dimensions = array<i32: 1>} : vector<8x8xi32>
    %12 = vector.broadcast %10 : i32 to vector<8x8xi32>
    %13 = arith.addi %12, %11 : vector<8x8xi32>
    %c8_i32_6 = arith.constant 8 : i32
    %14 = vector.broadcast %c8_i32_6 : i32 to vector<8x8xi32>
    %15 = arith.cmpi slt, %13, %14 : vector<8x8xi32>
    %cst_7 = arith.constant -1.000000e+30 : f32
    %16 = vector.broadcast %cst_7 : f32 to vector<8x8xf32>
    %17 = arith.select %15, %9, %16 : vector<8x8xi1>, vector<8x8xf32>
    %c0_8 = arith.constant 0 : index
    %c0_9 = arith.constant 0 : index
    %18 = vector.load %arg7[%c0_8, %c0_9] : memref<8x1xf32, #tpu.memory_space<vmem>>, vector<8x1xf32>
    %cst_10 = arith.constant dense<0xFF800000> : vector<8xf32>
    %19 = vector.multi_reduction <maximumf>, %17, %cst_10 [1] : vector<8x8xf32> to vector<8xf32>
    %20 = vector.shape_cast %19 : vector<8xf32> to vector<8x1xf32>
    %21 = arith.maximumf %18, %20 : vector<8x1xf32>
    %22 = arith.subf %18, %21 : vector<8x1xf32>
    %23 = math.exp %22 : vector<8x1xf32>
    %24 = vector.broadcast %21 : vector<8x1xf32> to vector<8x8xf32>
    %25 = arith.subf %17, %24 : vector<8x8xf32>
    %26 = math.exp %25 : vector<8x8xf32>
    %c0_11 = arith.constant 0 : index
    %c0_12 = arith.constant 0 : index
    %27 = vector.load %arg8[%c0_11, %c0_12] : memref<8x1xf32, #tpu.memory_space<vmem>>, vector<8x1xf32>
    %28 = arith.mulf %23, %27 : vector<8x1xf32>
    %cst_13 = arith.constant dense<0.000000e+00> : vector<8xf32>
    %29 = vector.multi_reduction <add>, %26, %cst_13 [1] : vector<8x8xf32> to vector<8xf32>
    %30 = vector.shape_cast %29 : vector<8xf32> to vector<8x1xf32>
    %31 = arith.addf %28, %30 : vector<8x1xf32>
    %c0_14 = arith.constant 0 : index
    %c0_15 = arith.constant 0 : index
    %32 = vector.load %arg8[%c0_14, %c0_15] : memref<8x1xf32, #tpu.memory_space<vmem>>, vector<8x1xf32>
    tpu.vector_store %arg8[%c0_14, %c0_15], %31 {strides = array<i32>} : memref<8x1xf32, #tpu.memory_space<vmem>>, vector<8x1xf32>,
    %c0_16 = arith.constant 0 : index
    %c0_17 = arith.constant 0 : index
    %33 = vector.load %arg9[%c0_16, %c0_17] : memref<8x128xf32, #tpu.memory_space<vmem>>, vector<8x128xf32>
    %34 = vector.broadcast %23 : vector<8x1xf32> to vector<8x128xf32>
    %35 = arith.mulf %34, %33 : vector<8x128xf32>
    %cst_18 = arith.constant dense<0.000000e+00> : vector<8x128xf32>
    %36 = tpu.matmul %26, %7, %cst_18 {dimension_numbers = #tpu.dot_dimension_numbers<[1], [0], [0], [1], [0, 0, 1, 1], [], []>} : vector<8x8xf32>, vector<8x128xf32>, vector<8x128xf32> -> vector<8x128xf32>
    %37 = arith.addf %35, %36 : vector<8x128xf32>
    %c0_19 = arith.constant 0 : index
    %c0_20 = arith.constant 0 : index
    %38 = vector.load %arg9[%c0_19, %c0_20] : memref<8x128xf32, #tpu.memory_space<vmem>>, vector<8x128xf32>
    tpu.vector_store %arg9[%c0_19, %c0_20], %37 {strides = array<i32>} : memref<8x128xf32, #tpu.memory_space<vmem>>, vector<8x128xf32>,
    %c0_21 = arith.constant 0 : index
    %c0_22 = arith.constant 0 : index
    %39 = vector.load %arg7[%c0_21, %c0_22] : memref<8x1xf32, #tpu.memory_space<vmem>>, vector<8x1xf32>
    tpu.vector_store %arg7[%c0_21, %c0_22], %21 {strides = array<i32>} : memref<8x1xf32, #tpu.memory_space<vmem>>, vector<8x1xf32>,
    %c0_i32_23 = arith.constant 0 : i32
    %40 = arith.cmpi eq, %arg1, %c0_i32_23 : i32
    %41 = arith.extui %40 : i1 to i32
    %c0_i32_24 = arith.constant 0 : i32
    %42 = arith.cmpi ne, %41, %c0_i32_24 : i32
    scf.if %42 {
      %c0_25 = arith.constant 0 : index
      %c0_26 = arith.constant 0 : index
      %43 = vector.load %arg8[%c0_25, %c0_26] : memref<8x1xf32, #tpu.memory_space<vmem>>, vector<8x1xf32>
      %44 = tpu.reciprocal %43 : vector<8x1xf32> -> vector<8x1xf32>
      %c0_27 = arith.constant 0 : index
      %c0_28 = arith.constant 0 : index
      %45 = vector.load %arg9[%c0_27, %c0_28] : memref<8x128xf32, #tpu.memory_space<vmem>>, vector<8x128xf32>
      %46 = vector.broadcast %44 : vector<8x1xf32> to vector<8x128xf32>
      %47 = arith.mulf %45, %46 : vector<8x128xf32>
      %c0_29 = arith.constant 0 : index
      %c0_30 = arith.constant 0 : index
      %48 = vector.load %arg5[%c0_29, %c0_30] : memref<8x128xf32, #tpu.memory_space<vmem>>, vector<8x128xf32>
      tpu.vector_store %arg5[%c0_29, %c0_30], %47 {strides = array<i32>} : memref<8x128xf32, #tpu.memory_space<vmem>>, vector<8x128xf32>,
    } else {
    }
    return
  }
  func.func @transform_0(%arg0: i32, %arg1: i32) -> (i32, i32) {
    %c0_i32 = arith.constant 0 : i32
    %c0_i32_0 = arith.constant 0 : i32
    return %arg0, %c0_i32 : i32, i32
  }
  func.func @transform_1(%arg0: i32, %arg1: i32) -> (i32, i32) {
    %c0_i32 = arith.constant 0 : i32
    %c0_i32_0 = arith.constant 0 : i32
    return %arg1, %c0_i32 : i32, i32
  }
  func.func @transform_2(%arg0: i32, %arg1: i32) -> (i32, i32) {
    %c0_i32 = arith.constant 0 : i32
    %c0_i32_0 = arith.constant 0 : i32
    %c0_i32_1 = arith.constant 0 : i32
    return %c0_i32, %c0_i32_0 : i32, i32
  }
  func.func @transform_3(%arg0: i32, %arg1: i32) -> (i32, i32) {
    %c0_i32 = arith.constant 0 : i32
    %c0_i32_0 = arith.constant 0 : i32
    return %arg0, %c0_i32 : i32, i32
  }
}

</mosaic_0001>

<llo_original>
// kernel: tpu_custom_call.1
$region0: #{tpu_custom_call.1}
  #allocation0 [shape = 'u32[]', space=smem, size = 0x4, offset = 0x4, fixed_abs, tag = 'smem constant byte address 0x4 - core index']
  #allocation1 [shape = 'u32[144,128]{1,0:T(1,128)}', space=vmem, size = 0x12000, scoped, tag = 'internal scratch']
  #allocation2 [shape = 'f32[8,128]{1,0:T(8,128)}', space=vmem, size = 0x1000, scoped, tag = 'scratch operand']
  #allocation3 [shape = 'f32[8,1]{1,0:T(8,128)}', space=vmem, size = 0x1000, scoped, tag = 'scratch operand']
  #allocation4 [shape = 'f32[8,1]{1,0:T(8,128)}', space=vmem, size = 0x1000, scoped, tag = 'scratch operand']
  #allocation5 [shape = 'f32[8,128]{1,0:T(8,128)}', space=vmem, size = 0x1000, scoped, tag = 'scratch operand']
  %s0 = inlined_call_operand.hbm [shape: f32[8,16], index: 0, kind: input, shape index: {}]
  %s1 = inlined_call_operand.hbm [shape: f32[8,16], index: 1, kind: input, shape index: {}]
  %s2 = inlined_call_operand.hbm [shape: f32[16,384], index: 2, kind: input, shape index: {}]
  %s3 = inlined_call_operand.hbm [shape: f32[8,128], index: 3, kind: output, shape index: {}]
  %s4 = sld [smem:[#allocation0]]
  $region42: #{tpu_custom_call.1} parent=0
    _
  %s6 = ssub.s32 1, %s4
  %s7 = scalar_select 0, %s6, %s4
  $region1: #{tpu_custom_call.1} parent=0
    #allocation6 [shape = 'u8[4096]{0}', space=vmem, size = 0x1000, scoped, tag = 'input window, operand 0, single buffered']
    #allocation7 [shape = 's32[1]{0}', space=sflag, size = 0x4, scoped, tag = 'scoped memory for tpu_custom_call.1']
    #allocation8 [shape = 's32[1]{0}', space=sflag, size = 0x4, scoped, tag = 'scoped memory for tpu_custom_call.1']
    #allocation9 [shape = 'u8[4096]{0}', space=vmem, size = 0x1000, scoped, tag = 'input window, operand 1, single buffered']
    #allocation10 [shape = 's32[1]{0}', space=sflag, size = 0x4, scoped, tag = 'scoped memory for tpu_custom_call.1']
    #allocation11 [shape = 'u8[24576]{0}', space=vmem, size = 0x6000, scoped, tag = 'input window, operand 2, single buffered']
    #allocation12 [shape = 'u8[4096]{0}', space=vmem, size = 0x1000, scoped, tag = 'output window, operand 0, single buffered']
    %8 = vsyncpa [#allocation7], 0
    %9 = vsyncpa [#allocation10], 0
    %10 = vsyncpa [#allocation8], 0
    // Predicated region
    $region2: #{tpu_custom_call.1} parent=1 // pred_check
      _
    $region3: #{tpu_custom_call.1} parent=1 // pred_check_branch
      %12 = sbr.rel (0) target = $region5
    $region4: #{tpu_custom_call.1} parent=1 // pred_region
      %s14 = ssub.s32 128, 128
      %15 = vsyncadd [#allocation7], %s14
      %s17 = sshll.u32 [#allocation6], 4
      %s18 = int_to_ptr.vmem [resolvable:$true] %s17
      %20 = dma.hbm_to_vmem [thread:$0]  %s0, 128, %s18, [#allocation7]
    $region5: #{tpu_custom_call.1} parent=1 // pred_fallthru
      _
    // Predicated region
    $region6: #{tpu_custom_call.1} parent=1 // pred_check
      _
    $region7: #{tpu_custom_call.1} parent=1 // pred_check_branch
      %22 = sbr.rel (0) target = $region9
    $region8: #{tpu_custom_call.1} parent=1 // pred_region
      %s24 = ssub.s32 128, 128
      %25 = vsyncadd [#allocation10], %s24
      %s27 = sshll.u32 [#allocation9], 4
      %s28 = int_to_ptr.vmem [resolvable:$true] %s27
      %30 = dma.hbm_to_vmem [thread:$0]  %s1, 128, %s28, [#allocation10]
    $region9: #{tpu_custom_call.1} parent=1 // pred_fallthru
      _
    // Predicated region
    $region10: #{tpu_custom_call.1} parent=1 // pred_check
      _
    $region11: #{tpu_custom_call.1} parent=1 // pred_check_branch
      %32 = sbr.rel (0) target = $region13
    $region12: #{tpu_custom_call.1} parent=1 // pred_region
      %s34 = ssub.s32 768, 768
      %35 = vsyncadd [#allocation10], %s34
      %s36 = sshll.u32 [#allocation11], 4
      %s37 = int_to_ptr.vmem [resolvable:$true] %s36
      %42 = dma.hbm_to_vmem [thread:$0]  %s2, 768, %s37, [#allocation10], 384, 384, 24
    $region13: #{tpu_custom_call.1} parent=1 // pred_fallthru
      _
    // Predicated region
    $region14: #{tpu_custom_call.1} parent=1 // pred_check
      _
    $region15: #{tpu_custom_call.1} parent=1 // pred_check_branch
      %44 = sbr.rel (0) target = $region17
    $region16: #{tpu_custom_call.1} parent=1 // pred_region
      %45 = dma.done [#allocation7], 128
    $region17: #{tpu_custom_call.1} parent=1 // pred_fallthru
      _
    // Predicated region
    $region18: #{tpu_custom_call.1} parent=1 // pred_check
      _
    $region19: #{tpu_custom_call.1} parent=1 // pred_check_branch
      %47 = sbr.rel (0) target = $region21
    $region20: #{tpu_custom_call.1} parent=1 // pred_region
      %48 = dma.done [#allocation10], 128
    $region21: #{tpu_custom_call.1} parent=1 // pred_fallthru
      _
    // Predicated region
    $region22: #{tpu_custom_call.1} parent=1 // pred_check
      _
    $region23: #{tpu_custom_call.1} parent=1 // pred_check_branch
      %50 = sbr.rel (0) target = $region25
    $region24: #{tpu_custom_call.1} parent=1 // pred_region
      %51 = dma.done [#allocation10], 768
    $region25: #{tpu_custom_call.1} parent=1 // pred_fallthru
      _
    %p52 = scmp.eq.s32.totalorder 0, 0
    // Predicated region
    $region26: #{tpu_custom_call.1} parent=1 // pred_check
      %p53 = pneg %p52
    $region27: #{tpu_custom_call.1} parent=1 // pred_check_branch
      %55 = sbr.rel (%p53) target = $region29
    $region28: #{tpu_custom_call.1} parent=1 // pred_region
      %v56 = vld [vmem:[#allocation6] sm:$0xff]
      %v57 = vld [vmem:[#allocation11] sm:$0xff]
      %v58 = vld [vmem:[#allocation11 + $0x18] sm:$0xff]
      %vm59 = vcmask 130048
      %v61 = vsel %vm59, %v56, 0
      %63 = vmatprep.subr.mxu0 0.0
      %64 = vmatpush1.msra.mxu0 %v57
      %65 = vmatprep.subr.mxu0 0.0
      %66 = vmatpush1.msra.mxu0 %v58
      %67 = vmatprep.subr.mxu0 0.0
      %68 = vmatpush1.msra.mxu0 0.0
      %69 = vmatprep.subr.mxu0 0.0
      %70 = vmatpush1.msra.mxu0 0.0
      %71 = vmatprep.subr.mxu0 0.0
      %72 = vmatpush1.msra.mxu0 0.0
      %73 = vmatprep.subr.mxu0 0.0
      %74 = vmatpush1.msra.mxu0 0.0
      %75 = vmatprep.subr.mxu0 0.0
      %76 = vmatpush1.msra.mxu0 0.0
      %77 = vmatprep.subr.mxu0 0.0
      %78 = vmatpush1.msra.mxu0 0.0
      %79 = vmatprep.subr.mxu0 0.0
      %80 = vmatpush1.msra.mxu0 0.0
      %81 = vmatprep.subr.mxu0 0.0
      %82 = vmatpush1.msra.mxu0 0.0
      %83 = vmatprep.subr.mxu0 0.0
      %84 = vmatpush1.msra.mxu0 0.0
      %85 = vmatprep.subr.mxu0 0.0
      %86 = vmatpush1.msra.mxu0 0.0
      %87 = vmatprep.subr.mxu0 0.0
      %88 = vmatpush1.msra.mxu0 0.0
      %89 = vmatprep.subr.mxu0 0.0
      %90 = vmatpush1.msra.mxu0 0.0
      %91 = vmatprep.subr.mxu0 0.0
      %92 = vmatpush1.msra.mxu0 0.0
      %93 = vmatprep.subr.mxu0 0.0
      %94 = vmatpush1.msra.mxu0 0.0
      %95 = vmatprep.subr.mxu0 0.0
      %96 = vmatpush1.msra.mxu0 0.0
      %97 = vmatprep.subr.mxu0 0.0
      %98 = vmatpush1.msra.mxu0 0.0
      %99 = vmatprep.subr.mxu0 0.0
      %100 = vmatpush1.msra.mxu0 0.0
      %101 = vmatprep.subr.mxu0 0.0
      %102 = vmatpush1.msra.mxu0 0.0
      %103 = vmatprep.subr.mxu0 0.0
      %104 = vmatpush1.msra.mxu0 0.0
      %105 = vmatprep.subr.mxu0 0.0
      %106 = vmatpush1.msra.mxu0 0.0
      %107 = vmatprep.subr.mxu0 0.0
      %108 = vmatpush1.msra.mxu0 0.0
      %109 = vmatprep.subr.mxu0 0.0
      %110 = vmatpush1.msra.mxu0 0.0
      %111 = vmatprep.subr.mxu0 0.0
      %112 = vmatpush1.msra.mxu0 0.0
      %113 = vmatprep.subr.mxu0 0.0
      %114 = vmatpush1.msra.mxu0 0.0
      %115 = vmatprep.subr.mxu0 0.0
      %116 = vmatpush1.msra.mxu0 0.0
      %117 = vmatprep.subr.mxu0 0.0
      %118 = vmatpush1.msra.mxu0 0.0
      %119 = vmatprep.subr.mxu0 0.0
      %120 = vmatpush1.msra.mxu0 0.0
      %121 = vmatprep.subr.mxu0 0.0
      %122 = vmatpush1.msra.mxu0 0.0
      %123 = vmatprep.subr.mxu0 0.0
      %124 = vmatpush1.msra.mxu0 0.0
      %125 = vmatprep.subr.mxu0 0.0
      %126 = vmatpush1.msra.mxu0 0.0
      %127 = vmatprep.mubr.f32.mxu0 0.0
      %128 = vmatmul.mubr.f32.gmra.mrb[0].mxu0 %v61
      %v129 = vpop.f32.mrb[0].mxu0
      %v130 = vadd.f32 0.0, %v129
      %v131 = vpop.f32.mrb[0].mxu0
      %132 = vdwg.mxu0
      %v133 = vmul.f32 %v130, 0.17677669
      %134 = vst [vmem:[#allocation2] sm:$0xff] %v133
      %vm135 = vcmask 7168
      %136 = vst.msk [vmem:[#allocation3] sm:$0xff] %vm135, -1e+30
      %137 = vst.msk [vmem:[#allocation4] sm:$0xff] %vm135, 0.0
      %138 = vst [vmem:[#allocation5] sm:$0xff] 0.0
    $region29: #{tpu_custom_call.1} parent=1 // pred_fallthru
      _
    %v139 = vld [vmem:[#allocation9] sm:$0xff]
    %v140 = vld [vmem:[#allocation11 + $0x8] sm:$0xff]
    %v141 = vld [vmem:[#allocation11 + $0x10] sm:$0xff]
    %v142 = vld [vmem:[#allocation11 + $0x20] sm:$0xff]
    %v143 = vld [vmem:[#allocation11 + $0x28] sm:$0xff]
    %vm144 = vcmask 130048
    %v146 = vsel %vm144, %v139, 0
    %148 = vmatprep.subr.mxu0 %v141
    %149 = vmatpush1.msra.mxu0 %v140
    %150 = vmatprep.subr.mxu0 %v143
    %151 = vmatpush1.msra.mxu0 %v142
    %152 = vmatprep.subr.mxu0 0.0
    %153 = vmatpush1.msra.mxu0 0.0
    %154 = vmatprep.subr.mxu0 0.0
    %155 = vmatpush1.msra.mxu0 0.0
    %156 = vmatprep.subr.mxu0 0.0
    %157 = vmatpush1.msra.mxu0 0.0
    %158 = vmatprep.subr.mxu0 0.0
    %159 = vmatpush1.msra.mxu0 0.0
    %160 = vmatprep.subr.mxu0 0.0
    %161 = vmatpush1.msra.mxu0 0.0
    %162 = vmatprep.subr.mxu0 0.0
    %163 = vmatpush1.msra.mxu0 0.0
    %164 = vmatprep.subr.mxu0 0.0
    %165 = vmatpush1.msra.mxu0 0.0
    %166 = vmatprep.subr.mxu0 0.0
    %167 = vmatpush1.msra.mxu0 0.0
    %168 = vmatprep.subr.mxu0 0.0
    %169 = vmatpush1.msra.mxu0 0.0
    %170 = vmatprep.subr.mxu0 0.0
    %171 = vmatpush1.msra.mxu0 0.0
    %172 = vmatprep.subr.mxu0 0.0
    %173 = vmatpush1.msra.mxu0 0.0
    %174 = vmatprep.subr.mxu0 0.0
    %175 = vmatpush1.msra.mxu0 0.0
    %176 = vmatprep.subr.mxu0 0.0
    %177 = vmatpush1.msra.mxu0 0.0
    %178 = vmatprep.subr.mxu0 0.0
    %179 = vmatpush1.msra.mxu0 0.0
    %180 = vmatprep.subr.mxu0 0.0
    %181 = vmatpush1.msra.mxu0 0.0
    %182 = vmatprep.subr.mxu0 0.0
    %183 = vmatpush1.msra.mxu0 0.0
    %184 = vmatprep.subr.mxu0 0.0
    %185 = vmatpush1.msra.mxu0 0.0
    %186 = vmatprep.subr.mxu0 0.0
    %187 = vmatpush1.msra.mxu0 0.0
    %188 = vmatprep.subr.mxu0 0.0
    %189 = vmatpush1.msra.mxu0 0.0
    %190 = vmatprep.subr.mxu0 0.0
    %191 = vmatpush1.msra.mxu0 0.0
    %192 = vmatprep.subr.mxu0 0.0
    %193 = vmatpush1.msra.mxu0 0.0
    %194 = vmatprep.subr.mxu0 0.0
    %195 = vmatpush1.msra.mxu0 0.0
    %196 = vmatprep.subr.mxu0 0.0
    %197 = vmatpush1.msra.mxu0 0.0
    %198 = vmatprep.subr.mxu0 0.0
    %199 = vmatpush1.msra.mxu0 0.0
    %200 = vmatprep.subr.mxu0 0.0
    %201 = vmatpush1.msra.mxu0 0.0
    %202 = vmatprep.subr.mxu0 0.0
    %203 = vmatpush1.msra.mxu0 0.0
    %204 = vmatprep.subr.mxu0 0.0
    %205 = vmatpush1.msra.mxu0 0.0
    %206 = vmatprep.subr.mxu0 0.0
    %207 = vmatpush1.msra.mxu0 0.0
    %208 = vmatprep.subr.mxu0 0.0
    %209 = vmatpush1.msra.mxu0 0.0
    %210 = vmatprep.subr.mxu0 0.0
    %211 = vmatpush1.msra.mxu0 0.0
    %212 = vmatprep.mubr.f32.mxu0 0.0
    %213 = vmatmul.mubr.f32.gmra.mrb[0].mxu0 %v146
    %v214 = vpop.f32.mrb[0].mxu0
    %v215 = vadd.f32 0.0, %v214
    %v216 = vpop.f32.mrb[0].mxu0
    %v217 = vadd.f32 0.0, %v216
    %218 = vdwg.mxu0
    %v219 = vld [vmem:[#allocation2] sm:$0xff]
    %220 = vmatprep.subr.mxu0 0.0
    %221 = vmatpush1.xpose.msra.mxu0 %v215
    %222 = vmatprep.subr.mxu0 0.0
    %223 = vmatpush1.xpose.msra.mxu0 0.0
    %224 = vmatprep.subr.mxu0 0.0
    %225 = vmatpush1.xpose.msra.mxu0 0.0
    %226 = vmatprep.subr.mxu0 0.0
    %227 = vmatpush1.xpose.msra.mxu0 0.0
    %228 = vmatprep.subr.mxu0 0.0
    %229 = vmatpush1.xpose.msra.mxu0 0.0
    %230 = vmatprep.subr.mxu0 0.0
    %231 = vmatpush1.xpose.msra.mxu0 0.0
    %232 = vmatprep.subr.mxu0 0.0
    %233 = vmatpush1.xpose.msra.mxu0 0.0
    %234 = vmatprep.subr.mxu0 0.0
    %235 = vmatpush1.xpose.msra.mxu0 0.0
    %236 = vmatprep.subr.mxu0 0.0
    %237 = vmatpush1.xpose.msra.mxu0 0.0
    %238 = vmatprep.subr.mxu0 0.0
    %239 = vmatpush1.xpose.msra.mxu0 0.0
    %240 = vmatprep.subr.mxu0 0.0
    %241 = vmatpush1.xpose.msra.mxu0 0.0
    %242 = vmatprep.subr.mxu0 0.0
    %243 = vmatpush1.xpose.msra.mxu0 0.0
    %244 = vmatprep.subr.mxu0 0.0
    %245 = vmatpush1.xpose.msra.mxu0 0.0
    %246 = vmatprep.subr.mxu0 0.0
    %247 = vmatpush1.xpose.msra.mxu0 0.0
    %248 = vmatprep.subr.mxu0 0.0
    %249 = vmatpush1.xpose.msra.mxu0 0.0
    %250 = vmatprep.subr.mxu0 0.0
    %251 = vmatpush1.xpose.msra.mxu0 0.0
    %252 = vmatprep.subr.mxu0 0.0
    %253 = vmatpush1.xpose.msra.mxu0 0.0
    %254 = vmatprep.subr.mxu0 0.0
    %255 = vmatpush1.xpose.msra.mxu0 0.0
    %256 = vmatprep.subr.mxu0 0.0
    %257 = vmatpush1.xpose.msra.mxu0 0.0
    %258 = vmatprep.subr.mxu0 0.0
    %259 = vmatpush1.xpose.msra.mxu0 0.0
    %260 = vmatprep.subr.mxu0 0.0
    %261 = vmatpush1.xpose.msra.mxu0 0.0
    %262 = vmatprep.subr.mxu0 0.0
    %263 = vmatpush1.xpose.msra.mxu0 0.0
    %264 = vmatprep.subr.mxu0 0.0
    %265 = vmatpush1.xpose.msra.mxu0 0.0
    %266 = vmatprep.subr.mxu0 0.0
    %267 = vmatpush1.xpose.msra.mxu0 0.0
    %268 = vmatprep.subr.mxu0 0.0
    %269 = vmatpush1.xpose.msra.mxu0 0.0
    %270 = vmatprep.subr.mxu0 0.0
    %271 = vmatpush1.xpose.msra.mxu0 0.0
    %272 = vmatprep.subr.mxu0 0.0
    %273 = vmatpush1.xpose.msra.mxu0 0.0
    %274 = vmatprep.subr.mxu0 0.0
    %275 = vmatpush1.xpose.msra.mxu0 0.0
    %276 = vmatprep.subr.mxu0 0.0
    %277 = vmatpush1.xpose.msra.mxu0 0.0
    %278 = vmatprep.subr.mxu0 0.0
    %279 = vmatpush1.xpose.msra.mxu0 0.0
    %280 = vmatprep.subr.mxu0 0.0
    %281 = vmatpush1.xpose.msra.mxu0 0.0
    %282 = vmatprep.subr.mxu0 0.0
    %283 = vmatpush1.xpose.msra.mxu0 0.0
    %284 = vmatprep.mubr.f32.mxu0 0.0
    %285 = vmatmul.mubr.f32.gmra.mrb[0].mxu0 %v219
    %v286 = vpop.f32.mrb[0].mxu0
    %v287 = vadd.f32 0.0, %v286
    %v288 = vpop.f32.mrb[0].mxu0
    %289 = vdwg.mxu0
    %s290 = smul.u32 0, 8
    %v291 = vlaneseq
    %v292 = vand.u32 %v291, 127
    %v293 = vstv %s290
    %v294 = vadd.s32 %v293, %v292
    %vm295 = vcmp.lt.s32.totalorder %v294, 8
    %v296 = vsel %vm295, %v287, -1e+30
    %v297 = vld [vmem:[#allocation3] sm:$0xff]
    %vm298 = vcmask 64512
    %v299 = vsel %vm298, %v296, -inf
    %300 = vmax.xlane.f32.xlu0 %v299
    %v301 = vpop.xlane.xlu0 %300
    %v302 = vmax.f32 %v297, %v301
    %v303 = vsub.f32 %v297, %v302
    %v304 = vmul.f32 %v303, 1.442695
    %v305 = vpow.pop %v304
    %307 = vset.pattern.permute.xlu0 0
    %308 = vperm.xlu0 %307, %v302
    %v309 = vpop.permute.xlu0 %308
    %v311 = vsub.f32 %v296, %v309
    %v312 = vmul.f32 %v311, 1.442695
    %v313 = vpow.pop %v312
    %v314 = vld [vmem:[#allocation4] sm:$0xff]
    %v315 = vmul.f32 %v305, %v314
    %v316 = vsel %vm298, %v313, 0.0
    %317 = vadd.xlane.f32.xlu0 %v316
    %v318 = vpop.xlane.xlu0 %317
    %v319 = vadd.f32 %v315, %v318
    %vm320 = vcmask 7168
    %321 = vst.msk [vmem:[#allocation4] sm:$0xff] %vm320, %v319
    %v322 = vld [vmem:[#allocation5] sm:$0xff]
    %324 = vset.pattern.permute.xlu0 0
    %325 = vperm.xlu0 %324, %v305
    %v326 = vpop.permute.xlu0 %325
    %v328 = vmul.f32 %v326, %v322
    %v330 = vsel %vm298, %v313, 0
    %332 = vmatprep.subr.mxu0 0.0
    %333 = vmatpush1.msra.mxu0 %v217
    %334 = vmatprep.subr.mxu0 0.0
    %335 = vmatpush1.msra.mxu0 0.0
    %336 = vmatprep.subr.mxu0 0.0
    %337 = vmatpush1.msra.mxu0 0.0
    %338 = vmatprep.subr.mxu0 0.0
    %339 = vmatpush1.msra.mxu0 0.0
    %340 = vmatprep.subr.mxu0 0.0
    %341 = vmatpush1.msra.mxu0 0.0
    %342 = vmatprep.subr.mxu0 0.0
    %343 = vmatpush1.msra.mxu0 0.0
    %344 = vmatprep.subr.mxu0 0.0
    %345 = vmatpush1.msra.mxu0 0.0
    %346 = vmatprep.subr.mxu0 0.0
    %347 = vmatpush1.msra.mxu0 0.0
    %348 = vmatprep.subr.mxu0 0.0
    %349 = vmatpush1.msra.mxu0 0.0
    %350 = vmatprep.subr.mxu0 0.0
    %351 = vmatpush1.msra.mxu0 0.0
    %352 = vmatprep.subr.mxu0 0.0
    %353 = vmatpush1.msra.mxu0 0.0
    %354 = vmatprep.subr.mxu0 0.0
    %355 = vmatpush1.msra.mxu0 0.0
    %356 = vmatprep.subr.mxu0 0.0
    %357 = vmatpush1.msra.mxu0 0.0
    %358 = vmatprep.subr.mxu0 0.0
    %359 = vmatpush1.msra.mxu0 0.0
    %360 = vmatprep.subr.mxu0 0.0
    %361 = vmatpush1.msra.mxu0 0.0
    %362 = vmatprep.subr.mxu0 0.0
    %363 = vmatpush1.msra.mxu0 0.0
    %364 = vmatprep.subr.mxu0 0.0
    %365 = vmatpush1.msra.mxu0 0.0
    %366 = vmatprep.subr.mxu0 0.0
    %367 = vmatpush1.msra.mxu0 0.0
    %368 = vmatprep.subr.mxu0 0.0
    %369 = vmatpush1.msra.mxu0 0.0
    %370 = vmatprep.subr.mxu0 0.0
    %371 = vmatpush1.msra.mxu0 0.0
    %372 = vmatprep.subr.mxu0 0.0
    %373 = vmatpush1.msra.mxu0 0.0
    %374 = vmatprep.subr.mxu0 0.0
    %375 = vmatpush1.msra.mxu0 0.0
    %376 = vmatprep.subr.mxu0 0.0
    %377 = vmatpush1.msra.mxu0 0.0
    %378 = vmatprep.subr.mxu0 0.0
    %379 = vmatpush1.msra.mxu0 0.0
    %380 = vmatprep.subr.mxu0 0.0
    %381 = vmatpush1.msra.mxu0 0.0
    %382 = vmatprep.subr.mxu0 0.0
    %383 = vmatpush1.msra.mxu0 0.0
    %384 = vmatprep.subr.mxu0 0.0
    %385 = vmatpush1.msra.mxu0 0.0
    %386 = vmatprep.subr.mxu0 0.0
    %387 = vmatpush1.msra.mxu0 0.0
    %388 = vmatprep.subr.mxu0 0.0
    %389 = vmatpush1.msra.mxu0 0.0
    %390 = vmatprep.subr.mxu0 0.0
    %391 = vmatpush1.msra.mxu0 0.0
    %392 = vmatprep.subr.mxu0 0.0
    %393 = vmatpush1.msra.mxu0 0.0
    %394 = vmatprep.subr.mxu0 0.0
    %395 = vmatpush1.msra.mxu0 0.0
    %396 = vmatprep.mubr.f32.mxu0 0.0
    %397 = vmatmul.mubr.f32.gmra.mrb[0].mxu0 %v330
    %v398 = vpop.f32.mrb[0].mxu0
    %v399 = vadd.f32 0.0, %v398
    %v400 = vpop.f32.mrb[0].mxu0
    %401 = vdwg.mxu0
    %v402 = vadd.f32 %v328, %v399
    %403 = vst [vmem:[#allocation5] sm:$0xff] %v402
    %404 = vst.msk [vmem:[#allocation3] sm:$0xff] %vm320, %v302
    // Predicated region
    $region30: #{tpu_custom_call.1} parent=1 // pred_check
      %p405 = pneg %p52
    $region31: #{tpu_custom_call.1} parent=1 // pred_check_branch
      %407 = sbr.rel (%p405) target = $region33
    $region32: #{tpu_custom_call.1} parent=1 // pred_region
      %v408 = vld [vmem:[#allocation4] sm:$0xff]
      %v409 = vrcp.pop %v408
      %v410 = vld [vmem:[#allocation5] sm:$0xff]
      %412 = vset.pattern.permute.xlu0 0
      %413 = vperm.xlu0 %412, %v409
      %v414 = vpop.permute.xlu0 %413
      %v416 = vmul.f32 %v410, %v414
      %417 = vst [vmem:[#allocation12] sm:$0xff] %v416
    $region33: #{tpu_custom_call.1} parent=1 // pred_fallthru
      _
    // Predicated region
    $region34: #{tpu_custom_call.1} parent=1 // pred_check
      _
    $region35: #{tpu_custom_call.1} parent=1 // pred_check_branch
      %419 = sbr.rel (0) target = $region37
    $region36: #{tpu_custom_call.1} parent=1 // pred_region
      %s421 = ssub.s32 128, 128
      %422 = vsyncadd [#allocation8], %s421
      %s424 = sshll.u32 [#allocation12], 4
      %s425 = int_to_ptr.vmem [resolvable:$true] %s424
      %427 = dma.vmem_to_hbm [thread:$0]  %s425, 128, %s3, [#allocation8]
    $region37: #{tpu_custom_call.1} parent=1 // pred_fallthru
      _
    // Predicated region
    $region38: #{tpu_custom_call.1} parent=1 // pred_check
      _
    $region39: #{tpu_custom_call.1} parent=1 // pred_check_branch
      %429 = sbr.rel (0) target = $region41
    $region40: #{tpu_custom_call.1} parent=1 // pred_region
      %430 = dma.done [#allocation8], 128
    $region41: #{tpu_custom_call.1} parent=1 // pred_fallthru
      _
    %431 = vsyncpa [#allocation7], 1
    %432 = vsyncpa [#allocation10], 1
    %433 = vsyncpa [#allocation8], 1

</llo_original>
